<compile_context>
chip_gen: v7x
topology: tpu7x:2x2x1
jax: 0.10.0
libtpu: 0.0.40
codegen_flags: <defaults>
</compile_context>

<pallas_src>
from collections import deque
from functools import partial

import jax
import jax.numpy as jnp
from jax.experimental import pallas as pl
from jax.experimental.pallas import tpu as pltpu

BB = 8  # sequences per grid block (one f32 sublane tile)


# ---------------------------------------------------------------------------
# Fused per-batch-block sequence kernel
# ---------------------------------------------------------------------------
def _narx_block_kernel(T, delay1, delay2,
                       xs_ref, w1_ref, w3_ref, w2_ref, b1_ref, b2_ref,
                       ybuf_ref):
    """Full-sequence NARX forward for BB independent sequences.

    xs_ref  : [T*BB, IN]   raw (un-delayed) inputs; x_t lives at rows t*BB..
    w1_ref  : [IN, HI]
    w3_ref  : [OUT, HI]
    w2_ref  : [HI, OUT]
    b1_ref  : [1, HI]
    b2_ref  : [1, OUT]
    ybuf_ref: [(T+delay2)*BB, OUT]  output buffer == y tapped-delay-line.
              rows [0, delay2*BB)          -> initial (zero) delay-line state
              rows [(t+delay2)*BB, +BB)    -> out_t
    """
    HI = w1_ref.shape[1]
    OUT = w2_ref.shape[1]

    # (4) zero only the initial delay-line rows; every other row is written
    # exactly once by the loop before HBM write-back.
    ybuf_ref[pl.ds(0, delay2 * BB), :] = jnp.zeros((delay2 * BB, OUT),
                                                   jnp.float32)

    w3 = w3_ref[...]
    w2 = w2_ref[...]
    b1 = b1_ref[...]
    b2 = b2_ref[...]

    # (3)+(6) hoisted recurrence-free exogenous contribution, kept in vregs.
    # Step t (t >= delay1) consumes x_{t-delay1}; only the first T-delay1
    # inputs are ever used and the shift is a static slice offset.
    d1 = min(delay1, T)
    if d1 < T:
        pre_all = jnp.dot(xs_ref[pl.ds(0, (T - d1) * BB), :], w1_ref[...],
                          preferred_element_type=jnp.float32) + b1
    else:
        pre_all = None  # all x-contributions are zero

    def run_steps(t0, n_steps, x_contrib):
        """Process steps t0..t0+n_steps-1 (mutually independent) as one slab."""
        rows = n_steps * BB
        y_del = ybuf_ref[pl.ds(t0 * BB, rows), :]          # = out_{t-delay2}
        # (2) tiny-K feedback matmul as VPU broadcast-MACs (off the MXU).
        z = x_contrib
        for k in range(OUT):
            z = z + y_del[:, k:k + 1] * w3[k:k + 1, :]
        h = jnp.tanh(z)                                     # EUP
        out = jnp.dot(h, w2, preferred_element_type=jnp.float32) + b2
        # (5) single store per slab, straight into the delay line / output.
        ybuf_ref[pl.ds((t0 + delay2) * BB, rows), :] = out

    # (1) slab loop: delay2 steps per iteration (fully unrolled; T is small).
    # TODO(synk): for large T switch to lax.fori_loop over slabs with
    # unroll=delay2 to bound code size / vreg live ranges.
    t0 = 0
    while t0 < T:
        g = min(delay2, T - t0)
        if t0 + g <= delay1:                 # whole slab before delay1
            run_steps(t0, g, b1)             # x-contribution is zero
        elif t0 >= delay1:                   # whole slab past delay1
            src = (t0 - delay1) * BB
            run_steps(t0, g, pre_all[src:src + g * BB])
        else:                                # slab straddles delay1: per-step
            for t in range(t0, t0 + g):
                if t < delay1:
                    run_steps(t, 1, b1)
                else:
                    src = (t - delay1) * BB
                    run_steps(t, 1, pre_all[src:src + BB])
        t0 += g


def narx_forward_sequence(xs, w1, w3, w2, b1, b2, delay1, delay2):
    """Run T NARX steps (on a cleared model) for B independent sequences in one
    fused Pallas call.

    xs : [T, B, in_features]  (x_t pushed at step t)
    returns [T, B, out_features]  (out_t produced at step t)
    """
    T, B, IN = xs.shape
    HI = w1.shape[1]
    OUT = w2.shape[1]
    assert delay1 >= 1 and delay2 >= 1, "each TDL needs at least one slot"
    assert B % BB == 0, "batch must be a multiple of 8 (sublane tile)"
    nb = B // BB

    # (7) batch-block-major layout: block j holds sequences [j*BB, (j+1)*BB).
    xs_r = (xs.astype(jnp.float32)
              .reshape(T, nb, BB, IN)
              .transpose(1, 0, 2, 3)
              .reshape(nb, T * BB, IN))

    rows_out = (T + delay2) * BB
    kernel = partial(_narx_block_kernel, T, delay1, delay2)
    wspec = lambda a: pl.BlockSpec(a.shape, lambda j: (0,) * a.ndim)

    out_r = pl.pallas_call(
        kernel,
        grid=(nb,),
        out_shape=jax.ShapeDtypeStruct((nb, rows_out, OUT), jnp.float32),
        in_specs=[
            pl.BlockSpec((None, T * BB, IN), lambda j: (j, 0, 0)),
            wspec(w1), wspec(w3), wspec(w2), wspec(b1), wspec(b2),
        ],
        out_specs=pl.BlockSpec((None, rows_out, OUT), lambda j: (j, 0, 0)),
        compiler_params=pltpu.CompilerParams(
            dimension_semantics=("parallel",)),   # both TCs on v7x
    )(xs_r, w1, w3, w2, b1, b2)

    out = (out_r.reshape(nb, T + delay2, BB, OUT)[:, delay2:]
                .transpose(1, 0, 2, 3)
                .reshape(T, B, OUT))
    return out


# ---------------------------------------------------------------------------
# Module wrapper (weights; forward_sequence == clear() + T torch forward()s)
# ---------------------------------------------------------------------------
class NARX:
    def __init__(self, in_features, hi_features, out_features, delay1, delay2,
                 key):
        self.in_features = in_features
        self.hi_features = hi_features
        self.out_features = out_features
        self.delay1 = delay1
        self.delay2 = delay2
        k1, k2, k3 = jax.random.split(key, 3)
        # torch.randn equivalents (standard normal), zero biases.
        self.w1 = jax.random.normal(k1, (in_features, hi_features), jnp.float32)
        self.w2 = jax.random.normal(k2, (hi_features, out_features), jnp.float32)
        self.w3 = jax.random.normal(k3, (out_features, hi_features), jnp.float32)
        self.b1 = jnp.zeros((1, hi_features), jnp.float32)
        self.b2 = jnp.zeros((1, out_features), jnp.float32)

    def forward_sequence(self, xs):
        """xs: [T, B, in_features] -> [T, B, out_features]."""
        return narx_forward_sequence(xs, self.w1, self.w3, self.w2,
                                     self.b1, self.b2, self.delay1, self.delay2)


# ---------------------------------------------------------------------------
# Correctness check against a step-by-step pure-JAX TDL simulation
# ---------------------------------------------------------------------------
if __name__ == "__main__":
    key = jax.random.PRNGKey(0)
    k_params, k_inputs = jax.random.split(key)

    in_features, hi_features, out_features = 4, 32, 4
    delay1, delay2 = 2, 2
    seq_len, batch = 8, 16   # 2 batch-blocks of 8 -> exercises the parallel grid

    model = NARX(in_features, hi_features, out_features, delay1, delay2,
                 k_params)
    xs = jax.random.normal(k_inputs, (seq_len, batch, in_features), jnp.float32)

    out = jax.block_until_ready(model.forward_sequence(xs))  # one fused call

    # Reference: mirror the torch module's per-step deque semantics.
    line1 = deque(jnp.zeros((batch, in_features), jnp.float32)
                  for _ in range(delay1))
    line2 = deque(jnp.zeros((batch, out_features), jnp.float32)
                  for _ in range(delay2))
    ref_outs = []
    for t in range(seq_len):
        x_del = line1.pop()
        y_del = line2.pop()
        h = jnp.tanh(x_del @ model.w1 + y_del @ model.w3 + model.b1)
        o = h @ model.w2 + model.b2
        line1.appendleft(xs[t])
        line2.appendleft(o)
        ref_outs.append(o)
    ref = jax.block_until_ready(jnp.stack(ref_outs, axis=0))

    if jnp.allclose(out, ref, atol=1e-3, rtol=1e-3):
        print("KERNEL_OK")
    else:
        print("KERNEL_MISMATCH")
</pallas_src>

<mosaic_0001>
module attributes {stable_mosaic.version = 11 : i64} {
  func.func @_narx_block_kernel(%arg0: i32, %arg1: memref<1x64x4xf32, #tpu.memory_space<vmem>>, %arg2: memref<4x32xf32, #tpu.memory_space<vmem>>, %arg3: memref<4x32xf32, #tpu.memory_space<vmem>>, %arg4: memref<32x4xf32, #tpu.memory_space<vmem>>, %arg5: memref<1x32xf32, #tpu.memory_space<vmem>>, %arg6: memref<1x4xf32, #tpu.memory_space<vmem>>, %arg7: memref<1x80x4xf32, #tpu.memory_space<vmem>>) attributes {dimension_semantics = [#tpu.dimension_semantics<parallel>], iteration_bounds = array<i64: 2>, scalar_prefetch = 0 : i64, scratch_operands = 0 : i64, tpu.core_type = #tpu.core_type<tc>, window_params = [{transform_indices = @transform_0, window_bounds = array<i64: 1, 64, 4>}, {pipeline_mode = #tpu.pipeline_mode<synchronous>, transform_indices = @transform_1, window_bounds = array<i64: 4, 32>}, {pipeline_mode = #tpu.pipeline_mode<synchronous>, transform_indices = @transform_2, window_bounds = array<i64: 4, 32>}, {pipeline_mode = #tpu.pipeline_mode<synchronous>, transform_indices = @transform_3, window_bounds = array<i64: 32, 4>}, {pipeline_mode = #tpu.pipeline_mode<synchronous>, transform_indices = @transform_4, window_bounds = array<i64: 1, 32>}, {pipeline_mode = #tpu.pipeline_mode<synchronous>, transform_indices = @transform_5, window_bounds = array<i64: 1, 4>}, {transform_indices = @transform_6, window_bounds = array<i64: 1, 80, 4>}]} {
    %cst = arith.constant 0.000000e+00 : f32
    %0 = vector.broadcast %cst : f32 to vector<16x4xf32>
    %c0 = arith.constant 0 : index
    %c0_0 = arith.constant 0 : index
    %c0_1 = arith.constant 0 : index
    %1 = vector.load %arg7[%c0, %c0_0, %c0_1] : memref<1x80x4xf32, #tpu.memory_space<vmem>>, vector<1x16x4xf32>
    %2 = vector.shape_cast %1 : vector<1x16x4xf32> to vector<16x4xf32>
    %3 = vector.shape_cast %0 : vector<16x4xf32> to vector<1x16x4xf32>
    tpu.vector_store %arg7[%c0, %c0_0, %c0_1], %3 {strides = array<i32>} : memref<1x80x4xf32, #tpu.memory_space<vmem>>, vector<1x16x4xf32>,
    %c0_2 = arith.constant 0 : index
    %c0_3 = arith.constant 0 : index
    %4 = vector.load %arg3[%c0_2, %c0_3] : memref<4x32xf32, #tpu.memory_space<vmem>>, vector<4x32xf32>
    %c0_4 = arith.constant 0 : index
    %c0_5 = arith.constant 0 : index
    %5 = vector.load %arg4[%c0_4, %c0_5] : memref<32x4xf32, #tpu.memory_space<vmem>>, vector<32x4xf32>
    %c0_6 = arith.constant 0 : index
    %c0_7 = arith.constant 0 : index
    %6 = vector.load %arg5[%c0_6, %c0_7] : memref<1x32xf32, #tpu.memory_space<vmem>>, vector<1x32xf32>
    %c0_8 = arith.constant 0 : index
    %c0_9 = arith.constant 0 : index
    %7 = vector.load %arg6[%c0_8, %c0_9] : memref<1x4xf32, #tpu.memory_space<vmem>>, vector<1x4xf32>
    %c0_10 = arith.constant 0 : index
    %c0_11 = arith.constant 0 : index
    %c0_12 = arith.constant 0 : index
    %8 = vector.load %arg1[%c0_10, %c0_11, %c0_12] : memref<1x64x4xf32, #tpu.memory_space<vmem>>, vector<1x48x4xf32>
    %9 = vector.shape_cast %8 : vector<1x48x4xf32> to vector<48x4xf32>
    %c0_13 = arith.constant 0 : index
    %c0_14 = arith.constant 0 : index
    %10 = vector.load %arg2[%c0_13, %c0_14] : memref<4x32xf32, #tpu.memory_space<vmem>>, vector<4x32xf32>
    %cst_15 = arith.constant dense<0.000000e+00> : vector<48x32xf32>
    %11 = tpu.matmul %9, %10, %cst_15 {dimension_numbers = #tpu.dot_dimension_numbers<[1], [0], [0], [1], [0, 0, 1, 1], [], []>} : vector<48x4xf32>, vector<4x32xf32>, vector<48x32xf32> -> vector<48x32xf32>
    %12 = vector.broadcast %6 : vector<1x32xf32> to vector<48x32xf32>
    %13 = arith.addf %11, %12 : vector<48x32xf32>
    %c0_16 = arith.constant 0 : index
    %c0_17 = arith.constant 0 : index
    %c0_18 = arith.constant 0 : index
    %14 = vector.load %arg7[%c0_16, %c0_17, %c0_18] : memref<1x80x4xf32, #tpu.memory_space<vmem>>, vector<1x16x4xf32>
    %15 = vector.shape_cast %14 : vector<1x16x4xf32> to vector<16x4xf32>
    %16 = vector.extract_strided_slice %15 {offsets = [0, 0], sizes = [16, 1], strides = [1, 1]} : vector<16x4xf32> to vector<16x1xf32>
    %17 = vector.extract_strided_slice %4 {offsets = [0, 0], sizes = [1, 32], strides = [1, 1]} : vector<4x32xf32> to vector<1x32xf32>
    %18 = vector.broadcast %16 : vector<16x1xf32> to vector<16x32xf32>
    %19 = vector.broadcast %17 : vector<1x32xf32> to vector<16x32xf32>
    %20 = arith.mulf %18, %19 : vector<16x32xf32>
    %21 = vector.broadcast %6 : vector<1x32xf32> to vector<16x32xf32>
    %22 = arith.addf %21, %20 : vector<16x32xf32>
    %23 = vector.extract_strided_slice %15 {offsets = [0, 1], sizes = [16, 1], strides = [1, 1]} : vector<16x4xf32> to vector<16x1xf32>
    %24 = vector.extract_strided_slice %4 {offsets = [1, 0], sizes = [1, 32], strides = [1, 1]} : vector<4x32xf32> to vector<1x32xf32>
    %25 = vector.broadcast %23 : vector<16x1xf32> to vector<16x32xf32>
    %26 = vector.broadcast %24 : vector<1x32xf32> to vector<16x32xf32>
    %27 = arith.mulf %25, %26 : vector<16x32xf32>
    %28 = arith.addf %22, %27 : vector<16x32xf32>
    %29 = vector.extract_strided_slice %15 {offsets = [0, 2], sizes = [16, 1], strides = [1, 1]} : vector<16x4xf32> to vector<16x1xf32>
    %30 = vector.extract_strided_slice %4 {offsets = [2, 0], sizes = [1, 32], strides = [1, 1]} : vector<4x32xf32> to vector<1x32xf32>
    %31 = vector.broadcast %29 : vector<16x1xf32> to vector<16x32xf32>
    %32 = vector.broadcast %30 : vector<1x32xf32> to vector<16x32xf32>
    %33 = arith.mulf %31, %32 : vector<16x32xf32>
    %34 = arith.addf %28, %33 : vector<16x32xf32>
    %35 = vector.extract_strided_slice %15 {offsets = [0, 3], sizes = [16, 1], strides = [1, 1]} : vector<16x4xf32> to vector<16x1xf32>
    %36 = vector.extract_strided_slice %4 {offsets = [3, 0], sizes = [1, 32], strides = [1, 1]} : vector<4x32xf32> to vector<1x32xf32>
    %37 = vector.broadcast %35 : vector<16x1xf32> to vector<16x32xf32>
    %38 = vector.broadcast %36 : vector<1x32xf32> to vector<16x32xf32>
    %39 = arith.mulf %37, %38 : vector<16x32xf32>
    %40 = arith.addf %34, %39 : vector<16x32xf32>
    %41 = math.tanh %40 : vector<16x32xf32>
    %cst_19 = arith.constant dense<0.000000e+00> : vector<16x4xf32>
    %42 = tpu.matmul %41, %5, %cst_19 {dimension_numbers = #tpu.dot_dimension_numbers<[1], [0], [0], [1], [0, 0, 1, 1], [], []>} : vector<16x32xf32>, vector<32x4xf32>, vector<16x4xf32> -> vector<16x4xf32>
    %43 = vector.broadcast %7 : vector<1x4xf32> to vector<16x4xf32>
    %44 = arith.addf %42, %43 : vector<16x4xf32>
    %c0_20 = arith.constant 0 : index
    %c16 = arith.constant 16 : index
    %c0_21 = arith.constant 0 : index
    %45 = vector.load %arg7[%c0_20, %c16, %c0_21] : memref<1x80x4xf32, #tpu.memory_space<vmem>>, vector<1x16x4xf32>
    %46 = vector.shape_cast %45 : vector<1x16x4xf32> to vector<16x4xf32>
    %47 = vector.shape_cast %44 : vector<16x4xf32> to vector<1x16x4xf32>
    tpu.vector_store %arg7[%c0_20, %c16, %c0_21], %47 {strides = array<i32>} : memref<1x80x4xf32, #tpu.memory_space<vmem>>, vector<1x16x4xf32>,
    %48 = vector.extract_strided_slice %13 {offsets = [0, 0], sizes = [16, 32], strides = [1, 1]} : vector<48x32xf32> to vector<16x32xf32>
    %c0_22 = arith.constant 0 : index
    %c16_23 = arith.constant 16 : index
    %c0_24 = arith.constant 0 : index
    %49 = vector.load %arg7[%c0_22, %c16_23, %c0_24] : memref<1x80x4xf32, #tpu.memory_space<vmem>>, vector<1x16x4xf32>
    %50 = vector.shape_cast %49 : vector<1x16x4xf32> to vector<16x4xf32>
    %51 = vector.extract_strided_slice %50 {offsets = [0, 0], sizes = [16, 1], strides = [1, 1]} : vector<16x4xf32> to vector<16x1xf32>
    %52 = vector.extract_strided_slice %4 {offsets = [0, 0], sizes = [1, 32], strides = [1, 1]} : vector<4x32xf32> to vector<1x32xf32>
    %53 = vector.broadcast %51 : vector<16x1xf32> to vector<16x32xf32>
    %54 = vector.broadcast %52 : vector<1x32xf32> to vector<16x32xf32>
    %55 = arith.mulf %53, %54 : vector<16x32xf32>
    %56 = arith.addf %48, %55 : vector<16x32xf32>
    %57 = vector.extract_strided_slice %50 {offsets = [0, 1], sizes = [16, 1], strides = [1, 1]} : vector<16x4xf32> to vector<16x1xf32>
    %58 = vector.extract_strided_slice %4 {offsets = [1, 0], sizes = [1, 32], strides = [1, 1]} : vector<4x32xf32> to vector<1x32xf32>
    %59 = vector.broadcast %57 : vector<16x1xf32> to vector<16x32xf32>
    %60 = vector.broadcast %58 : vector<1x32xf32> to vector<16x32xf32>
    %61 = arith.mulf %59, %60 : vector<16x32xf32>
    %62 = arith.addf %56, %61 : vector<16x32xf32>
    %63 = vector.extract_strided_slice %50 {offsets = [0, 2], sizes = [16, 1], strides = [1, 1]} : vector<16x4xf32> to vector<16x1xf32>
    %64 = vector.extract_strided_slice %4 {offsets = [2, 0], sizes = [1, 32], strides = [1, 1]} : vector<4x32xf32> to vector<1x32xf32>
    %65 = vector.broadcast %63 : vector<16x1xf32> to vector<16x32xf32>
    %66 = vector.broadcast %64 : vector<1x32xf32> to vector<16x32xf32>
    %67 = arith.mulf %65, %66 : vector<16x32xf32>
    %68 = arith.addf %62, %67 : vector<16x32xf32>
    %69 = vector.extract_strided_slice %50 {offsets = [0, 3], sizes = [16, 1], strides = [1, 1]} : vector<16x4xf32> to vector<16x1xf32>
    %70 = vector.extract_strided_slice %4 {offsets = [3, 0], sizes = [1, 32], strides = [1, 1]} : vector<4x32xf32> to vector<1x32xf32>
    %71 = vector.broadcast %69 : vector<16x1xf32> to vector<16x32xf32>
    %72 = vector.broadcast %70 : vector<1x32xf32> to vector<16x32xf32>
    %73 = arith.mulf %71, %72 : vector<16x32xf32>
    %74 = arith.addf %68, %73 : vector<16x32xf32>
    %75 = math.tanh %74 : vector<16x32xf32>
    %cst_25 = arith.constant dense<0.000000e+00> : vector<16x4xf32>
    %76 = tpu.matmul %75, %5, %cst_25 {dimension_numbers = #tpu.dot_dimension_numbers<[1], [0], [0], [1], [0, 0, 1, 1], [], []>} : vector<16x32xf32>, vector<32x4xf32>, vector<16x4xf32> -> vector<16x4xf32>
    %77 = vector.broadcast %7 : vector<1x4xf32> to vector<16x4xf32>
    %78 = arith.addf %76, %77 : vector<16x4xf32>
    %c0_26 = arith.constant 0 : index
    %c32 = arith.constant 32 : index
    %c0_27 = arith.constant 0 : index
    %79 = vector.load %arg7[%c0_26, %c32, %c0_27] : memref<1x80x4xf32, #tpu.memory_space<vmem>>, vector<1x16x4xf32>
    %80 = vector.shape_cast %79 : vector<1x16x4xf32> to vector<16x4xf32>
    %81 = vector.shape_cast %78 : vector<16x4xf32> to vector<1x16x4xf32>
    tpu.vector_store %arg7[%c0_26, %c32, %c0_27], %81 {strides = array<i32>} : memref<1x80x4xf32, #tpu.memory_space<vmem>>, vector<1x16x4xf32>,
    %82 = vector.extract_strided_slice %13 {offsets = [16, 0], sizes = [16, 32], strides = [1, 1]} : vector<48x32xf32> to vector<16x32xf32>
    %c0_28 = arith.constant 0 : index
    %c32_29 = arith.constant 32 : index
    %c0_30 = arith.constant 0 : index
    %83 = vector.load %arg7[%c0_28, %c32_29, %c0_30] : memref<1x80x4xf32, #tpu.memory_space<vmem>>, vector<1x16x4xf32>
    %84 = vector.shape_cast %83 : vector<1x16x4xf32> to vector<16x4xf32>
    %85 = vector.extract_strided_slice %84 {offsets = [0, 0], sizes = [16, 1], strides = [1, 1]} : vector<16x4xf32> to vector<16x1xf32>
    %86 = vector.extract_strided_slice %4 {offsets = [0, 0], sizes = [1, 32], strides = [1, 1]} : vector<4x32xf32> to vector<1x32xf32>
    %87 = vector.broadcast %85 : vector<16x1xf32> to vector<16x32xf32>
    %88 = vector.broadcast %86 : vector<1x32xf32> to vector<16x32xf32>
    %89 = arith.mulf %87, %88 : vector<16x32xf32>
    %90 = arith.addf %82, %89 : vector<16x32xf32>
    %91 = vector.extract_strided_slice %84 {offsets = [0, 1], sizes = [16, 1], strides = [1, 1]} : vector<16x4xf32> to vector<16x1xf32>
    %92 = vector.extract_strided_slice %4 {offsets = [1, 0], sizes = [1, 32], strides = [1, 1]} : vector<4x32xf32> to vector<1x32xf32>
    %93 = vector.broadcast %91 : vector<16x1xf32> to vector<16x32xf32>
    %94 = vector.broadcast %92 : vector<1x32xf32> to vector<16x32xf32>
    %95 = arith.mulf %93, %94 : vector<16x32xf32>
    %96 = arith.addf %90, %95 : vector<16x32xf32>
    %97 = vector.extract_strided_slice %84 {offsets = [0, 2], sizes = [16, 1], strides = [1, 1]} : vector<16x4xf32> to vector<16x1xf32>
    %98 = vector.extract_strided_slice %4 {offsets = [2, 0], sizes = [1, 32], strides = [1, 1]} : vector<4x32xf32> to vector<1x32xf32>
    %99 = vector.broadcast %97 : vector<16x1xf32> to vector<16x32xf32>
    %100 = vector.broadcast %98 : vector<1x32xf32> to vector<16x32xf32>
    %101 = arith.mulf %99, %100 : vector<16x32xf32>
    %102 = arith.addf %96, %101 : vector<16x32xf32>
    %103 = vector.extract_strided_slice %84 {offsets = [0, 3], sizes = [16, 1], strides = [1, 1]} : vector<16x4xf32> to vector<16x1xf32>
    %104 = vector.extract_strided_slice %4 {offsets = [3, 0], sizes = [1, 32], strides = [1, 1]} : vector<4x32xf32> to vector<1x32xf32>
    %105 = vector.broadcast %103 : vector<16x1xf32> to vector<16x32xf32>
    %106 = vector.broadcast %104 : vector<1x32xf32> to vector<16x32xf32>
    %107 = arith.mulf %105, %106 : vector<16x32xf32>
    %108 = arith.addf %102, %107 : vector<16x32xf32>
    %109 = math.tanh %108 : vector<16x32xf32>
    %cst_31 = arith.constant dense<0.000000e+00> : vector<16x4xf32>
    %110 = tpu.matmul %109, %5, %cst_31 {dimension_numbers = #tpu.dot_dimension_numbers<[1], [0], [0], [1], [0, 0, 1, 1], [], []>} : vector<16x32xf32>, vector<32x4xf32>, vector<16x4xf32> -> vector<16x4xf32>
    %111 = vector.broadcast %7 : vector<1x4xf32> to vector<16x4xf32>
    %112 = arith.addf %110, %111 : vector<16x4xf32>
    %c0_32 = arith.constant 0 : index
    %c48 = arith.constant 48 : index
    %c0_33 = arith.constant 0 : index
    %113 = vector.load %arg7[%c0_32, %c48, %c0_33] : memref<1x80x4xf32, #tpu.memory_space<vmem>>, vector<1x16x4xf32>
    %114 = vector.shape_cast %113 : vector<1x16x4xf32> to vector<16x4xf32>
    %115 = vector.shape_cast %112 : vector<16x4xf32> to vector<1x16x4xf32>
    tpu.vector_store %arg7[%c0_32, %c48, %c0_33], %115 {strides = array<i32>} : memref<1x80x4xf32, #tpu.memory_space<vmem>>, vector<1x16x4xf32>,
    %116 = vector.extract_strided_slice %13 {offsets = [32, 0], sizes = [16, 32], strides = [1, 1]} : vector<48x32xf32> to vector<16x32xf32>
    %c0_34 = arith.constant 0 : index
    %c48_35 = arith.constant 48 : index
    %c0_36 = arith.constant 0 : index
    %117 = vector.load %arg7[%c0_34, %c48_35, %c0_36] : memref<1x80x4xf32, #tpu.memory_space<vmem>>, vector<1x16x4xf32>
    %118 = vector.shape_cast %117 : vector<1x16x4xf32> to vector<16x4xf32>
    %119 = vector.extract_strided_slice %118 {offsets = [0, 0], sizes = [16, 1], strides = [1, 1]} : vector<16x4xf32> to vector<16x1xf32>
    %120 = vector.extract_strided_slice %4 {offsets = [0, 0], sizes = [1, 32], strides = [1, 1]} : vector<4x32xf32> to vector<1x32xf32>
    %121 = vector.broadcast %119 : vector<16x1xf32> to vector<16x32xf32>
    %122 = vector.broadcast %120 : vector<1x32xf32> to vector<16x32xf32>
    %123 = arith.mulf %121, %122 : vector<16x32xf32>
    %124 = arith.addf %116, %123 : vector<16x32xf32>
    %125 = vector.extract_strided_slice %118 {offsets = [0, 1], sizes = [16, 1], strides = [1, 1]} : vector<16x4xf32> to vector<16x1xf32>
    %126 = vector.extract_strided_slice %4 {offsets = [1, 0], sizes = [1, 32], strides = [1, 1]} : vector<4x32xf32> to vector<1x32xf32>
    %127 = vector.broadcast %125 : vector<16x1xf32> to vector<16x32xf32>
    %128 = vector.broadcast %126 : vector<1x32xf32> to vector<16x32xf32>
    %129 = arith.mulf %127, %128 : vector<16x32xf32>
    %130 = arith.addf %124, %129 : vector<16x32xf32>
    %131 = vector.extract_strided_slice %118 {offsets = [0, 2], sizes = [16, 1], strides = [1, 1]} : vector<16x4xf32> to vector<16x1xf32>
    %132 = vector.extract_strided_slice %4 {offsets = [2, 0], sizes = [1, 32], strides = [1, 1]} : vector<4x32xf32> to vector<1x32xf32>
    %133 = vector.broadcast %131 : vector<16x1xf32> to vector<16x32xf32>
    %134 = vector.broadcast %132 : vector<1x32xf32> to vector<16x32xf32>
    %135 = arith.mulf %133, %134 : vector<16x32xf32>
    %136 = arith.addf %130, %135 : vector<16x32xf32>
    %137 = vector.extract_strided_slice %118 {offsets = [0, 3], sizes = [16, 1], strides = [1, 1]} : vector<16x4xf32> to vector<16x1xf32>
    %138 = vector.extract_strided_slice %4 {offsets = [3, 0], sizes = [1, 32], strides = [1, 1]} : vector<4x32xf32> to vector<1x32xf32>
    %139 = vector.broadcast %137 : vector<16x1xf32> to vector<16x32xf32>
    %140 = vector.broadcast %138 : vector<1x32xf32> to vector<16x32xf32>
    %141 = arith.mulf %139, %140 : vector<16x32xf32>
    %142 = arith.addf %136, %141 : vector<16x32xf32>
    %143 = math.tanh %142 : vector<16x32xf32>
    %cst_37 = arith.constant dense<0.000000e+00> : vector<16x4xf32>
    %144 = tpu.matmul %143, %5, %cst_37 {dimension_numbers = #tpu.dot_dimension_numbers<[1], [0], [0], [1], [0, 0, 1, 1], [], []>} : vector<16x32xf32>, vector<32x4xf32>, vector<16x4xf32> -> vector<16x4xf32>
    %145 = vector.broadcast %7 : vector<1x4xf32> to vector<16x4xf32>
    %146 = arith.addf %144, %145 : vector<16x4xf32>
    %c0_38 = arith.constant 0 : index
    %c64 = arith.constant 64 : index
    %c0_39 = arith.constant 0 : index
    %147 = vector.load %arg7[%c0_38, %c64, %c0_39] : memref<1x80x4xf32, #tpu.memory_space<vmem>>, vector<1x16x4xf32>
    %148 = vector.shape_cast %147 : vector<1x16x4xf32> to vector<16x4xf32>
    %149 = vector.shape_cast %146 : vector<16x4xf32> to vector<1x16x4xf32>
    tpu.vector_store %arg7[%c0_38, %c64, %c0_39], %149 {strides = array<i32>} : memref<1x80x4xf32, #tpu.memory_space<vmem>>, vector<1x16x4xf32>,
    return
  }
  func.func @transform_0(%arg0: i32) -> (i32, i32, i32) {
    %c0_i32 = arith.constant 0 : i32
    %c0_i32_0 = arith.constant 0 : i32
    %c0_i32_1 = arith.constant 0 : i32
    return %arg0, %c0_i32, %c0_i32_0 : i32, i32, i32
  }
  func.func @transform_1(%arg0: i32) -> (i32, i32) {
    %c0_i32 = arith.constant 0 : i32
    %c0_i32_0 = arith.constant 0 : i32
    %c0_i32_1 = arith.constant 0 : i32
    return %c0_i32, %c0_i32_0 : i32, i32
  }
  func.func @transform_2(%arg0: i32) -> (i32, i32) {
    %c0_i32 = arith.constant 0 : i32
    %c0_i32_0 = arith.constant 0 : i32
    %c0_i32_1 = arith.constant 0 : i32
    return %c0_i32, %c0_i32_0 : i32, i32
  }
  func.func @transform_3(%arg0: i32) -> (i32, i32) {
    %c0_i32 = arith.constant 0 : i32
    %c0_i32_0 = arith.constant 0 : i32
    %c0_i32_1 = arith.constant 0 : i32
    return %c0_i32, %c0_i32_0 : i32, i32
  }
  func.func @transform_4(%arg0: i32) -> (i32, i32) {
    %c0_i32 = arith.constant 0 : i32
    %c0_i32_0 = arith.constant 0 : i32
    %c0_i32_1 = arith.constant 0 : i32
    return %c0_i32, %c0_i32_0 : i32, i32
  }
  func.func @transform_5(%arg0: i32) -> (i32, i32) {
    %c0_i32 = arith.constant 0 : i32
    %c0_i32_0 = arith.constant 0 : i32
    %c0_i32_1 = arith.constant 0 : i32
    return %c0_i32, %c0_i32_0 : i32, i32
  }
  func.func @transform_6(%arg0: i32) -> (i32, i32, i32) {
    %c0_i32 = arith.constant 0 : i32
    %c0_i32_0 = arith.constant 0 : i32
    %c0_i32_1 = arith.constant 0 : i32
    return %arg0, %c0_i32, %c0_i32_0 : i32, i32, i32
  }
}

</mosaic_0001>

<llo_original>
// kernel: tpu_custom_call.1
$region0: #{tpu_custom_call.1}
  #allocation0 [shape = 'u32[]', space=smem, size = 0x4, offset = 0x4, fixed_abs, tag = 'smem constant byte address 0x4 - core index']
  #allocation1 [shape = 'u32[144,128]{1,0:T(1,128)}', space=vmem, size = 0x12000, scoped, tag = 'internal scratch']
  %s0 = inlined_call_operand.vmem [shape: f32[2,64,4], index: 0, kind: input, shape index: {}]
  %s1 = inlined_call_operand.vmem [shape: f32[4,32], index: 1, kind: input, shape index: {}]
  %s2 = inlined_call_operand.vmem [shape: f32[4,32], index: 2, kind: input, shape index: {}]
  %s3 = inlined_call_operand.vmem [shape: f32[32,4], index: 3, kind: input, shape index: {}]
  %s4 = inlined_call_operand.vmem [shape: f32[1,32], index: 4, kind: input, shape index: {}]
  %s5 = inlined_call_operand.vmem [shape: f32[1,4], index: 5, kind: input, shape index: {}]
  %s6 = inlined_call_operand.vmem [shape: f32[2,80,4], index: 6, kind: output, shape index: {}]
  %s7 = sld [smem:[#allocation0]]
  $region57: #{tpu_custom_call.1} parent=0
    _
  %s9 = ssub.s32 1, %s7
  %s10 = scalar_select 0, %s9, %s7
  loop: start=0, step=1, limit=4
  $region2: #{tpu_custom_call.1} parent=0 // loop_pre_header
    _
  $region3: #{tpu_custom_call.1} parent=0 // loop_header
    %s12 = sphi 0, %s16
    %p13 = scmp.ge.s32.totalorder %s12, 4
    %s22 = sphi 0, %s24
    %s25 = sphi 0, %s22
    %s26 = sphi 0, %s25
    %s42 = sphi 0, %s26
    %s46 = sphi 0, %s46
    %s48 = sphi 0, %s46
    %s49 = sphi 0, %s48
    %s63 = sphi 0, %s49
    %s67 = sphi 0, %s67
    %s69 = sphi 0, %s67
    %s70 = sphi 0, %s69
    %s84 = sphi 0, %s70
    %s88 = sphi 0, %s88
    %s90 = sphi 0, %s88
    %s91 = sphi 0, %s90
    %s105 = sphi 0, %s91
    %s109 = sphi 0, %s109
    %s111 = sphi 0, %s109
    %s112 = sphi 0, %s111
    %s126 = sphi 0, %s112
    %s130 = sphi 0, %s130
    %s132 = sphi 0, %s130
    %s133 = sphi 0, %s132
    %s147 = sphi 0, %s133
    %s153 = sphi 0, %s155
    %s156 = sphi 0, %s153
    %s157 = sphi 0, %s156
    %s173 = sphi 0, %s157
  $region4: #{tpu_custom_call.1} parent=0 // loop_header_branch
    %15 = sbr.rel (%p13) target = $region8
  $region5: #{tpu_custom_call.1} parent=0 // loop_body
    %s17 = ssub.s32 %s12, 1
    %s18 = ssub.s32 %s12, 2
    %s19 = sadd.s32 %s12, 1
    %s20 = ssub.s32 %s12, %s19
    %p21 = scmp.eq.s32.totalorder %s20, 0
    %s23 = sadd.s32 %s22, 1
    %s24 = scalar_select %p21, %s22, %s23
    %p27 = pneg %p21
    %p28 = scmp.eq.s32.totalorder %s12, 1
    %p29 = por %p27, %p28
    %p30 = scmp.ne.s32.totalorder %s22, %s25
    %p31 = scmp.eq.s32.totalorder %s12, 0
    %p32 = por %p30, %p31
    %p33 = scmp.ne.s32.totalorder %s22, %s25
    %p34 = scmp.eq.s32.totalorder %s17, 1
    %p35 = por %p33, %p34
    %p36 = scmp.ne.s32.totalorder %s25, %s26
    %p37 = scmp.eq.s32.totalorder %s17, 0
    %p38 = por %p36, %p37
    %p39 = scmp.ne.s32.totalorder %s25, %s26
    %p40 = scmp.eq.s32.totalorder %s18, 1
    %p41 = por %p39, %p40
    %p43 = scmp.ne.s32.totalorder %s26, %s42
    %p44 = scmp.eq.s32.totalorder %s18, 0
    %p45 = por %p43, %p44
    %s47 = sadd.s32 %s46, 1
    %p50 = scmp.eq.s32.totalorder %s12, 1
    %p51 = scmp.ne.s32.totalorder %s46, %s48
    %p52 = scmp.eq.s32.totalorder %s12, 0
    %p53 = por %p51, %p52
    %p54 = scmp.ne.s32.totalorder %s46, %s48
    %p55 = scmp.eq.s32.totalorder %s17, 1
    %p56 = por %p54, %p55
    %p57 = scmp.ne.s32.totalorder %s48, %s49
    %p58 = scmp.eq.s32.totalorder %s17, 0
    %p59 = por %p57, %p58
    %p60 = scmp.ne.s32.totalorder %s48, %s49
    %p61 = scmp.eq.s32.totalorder %s18, 1
    %p62 = por %p60, %p61
    %p64 = scmp.ne.s32.totalorder %s49, %s63
    %p65 = scmp.eq.s32.totalorder %s18, 0
    %p66 = por %p64, %p65
    %s68 = sadd.s32 %s67, 1
    %p71 = scmp.eq.s32.totalorder %s12, 1
    %p72 = scmp.ne.s32.totalorder %s67, %s69
    %p73 = scmp.eq.s32.totalorder %s12, 0
    %p74 = por %p72, %p73
    %p75 = scmp.ne.s32.totalorder %s67, %s69
    %p76 = scmp.eq.s32.totalorder %s17, 1
    %p77 = por %p75, %p76
    %p78 = scmp.ne.s32.totalorder %s69, %s70
    %p79 = scmp.eq.s32.totalorder %s17, 0
    %p80 = por %p78, %p79
    %p81 = scmp.ne.s32.totalorder %s69, %s70
    %p82 = scmp.eq.s32.totalorder %s18, 1
    %p83 = por %p81, %p82
    %p85 = scmp.ne.s32.totalorder %s70, %s84
    %p86 = scmp.eq.s32.totalorder %s18, 0
    %p87 = por %p85, %p86
    %s89 = sadd.s32 %s88, 1
    %p92 = scmp.eq.s32.totalorder %s12, 1
    %p93 = scmp.ne.s32.totalorder %s88, %s90
    %p94 = scmp.eq.s32.totalorder %s12, 0
    %p95 = por %p93, %p94
    %p96 = scmp.ne.s32.totalorder %s88, %s90
    %p97 = scmp.eq.s32.totalorder %s17, 1
    %p98 = por %p96, %p97
    %p99 = scmp.ne.s32.totalorder %s90, %s91
    %p100 = scmp.eq.s32.totalorder %s17, 0
    %p101 = por %p99, %p100
    %p102 = scmp.ne.s32.totalorder %s90, %s91
    %p103 = scmp.eq.s32.totalorder %s18, 1
    %p104 = por %p102, %p103
    %p106 = scmp.ne.s32.totalorder %s91, %s105
    %p107 = scmp.eq.s32.totalorder %s18, 0
    %p108 = por %p106, %p107
    %s110 = sadd.s32 %s109, 1
    %p113 = scmp.eq.s32.totalorder %s12, 1
    %p114 = scmp.ne.s32.totalorder %s109, %s111
    %p115 = scmp.eq.s32.totalorder %s12, 0
    %p116 = por %p114, %p115
    %p117 = scmp.ne.s32.totalorder %s109, %s111
    %p118 = scmp.eq.s32.totalorder %s17, 1
    %p119 = por %p117, %p118
    %p120 = scmp.ne.s32.totalorder %s111, %s112
    %p121 = scmp.eq.s32.totalorder %s17, 0
    %p122 = por %p120, %p121
    %p123 = scmp.ne.s32.totalorder %s111, %s112
    %p124 = scmp.eq.s32.totalorder %s18, 1
    %p125 = por %p123, %p124
    %p127 = scmp.ne.s32.totalorder %s112, %s126
    %p128 = scmp.eq.s32.totalorder %s18, 0
    %p129 = por %p127, %p128
    %s131 = sadd.s32 %s130, 1
    %p134 = scmp.eq.s32.totalorder %s12, 1
    %p135 = scmp.ne.s32.totalorder %s130, %s132
    %p136 = scmp.eq.s32.totalorder %s12, 0
    %p137 = por %p135, %p136
    %p138 = scmp.ne.s32.totalorder %s130, %s132
    %p139 = scmp.eq.s32.totalorder %s17, 1
    %p140 = por %p138, %p139
    %p141 = scmp.ne.s32.totalorder %s132, %s133
    %p142 = scmp.eq.s32.totalorder %s17, 0
    %p143 = por %p141, %p142
    %p144 = scmp.ne.s32.totalorder %s132, %s133
    %p145 = scmp.eq.s32.totalorder %s18, 1
    %p146 = por %p144, %p145
    %p148 = scmp.ne.s32.totalorder %s133, %s147
    %p149 = scmp.eq.s32.totalorder %s18, 0
    %p150 = por %p148, %p149
    %s151 = ssub.s32 %s12, %s19
    %p152 = scmp.eq.s32.totalorder %s151, 0
    %s154 = sadd.s32 %s153, 1
    %s155 = scalar_select %p152, %s153, %s154
    %p158 = pneg %p152
    %p159 = scmp.eq.s32.totalorder %s12, 1
    %p160 = por %p158, %p159
    %p161 = scmp.ne.s32.totalorder %s153, %s156
    %p162 = scmp.eq.s32.totalorder %s12, 0
    %p163 = por %p161, %p162
    %p164 = scmp.ne.s32.totalorder %s153, %s156
    %p165 = scmp.eq.s32.totalorder %s17, 1
    %p166 = por %p164, %p165
    %p167 = scmp.ne.s32.totalorder %s156, %s157
    %p168 = scmp.eq.s32.totalorder %s17, 0
    %p169 = por %p167, %p168
    %p170 = scmp.ne.s32.totalorder %s156, %s157
    %p171 = scmp.eq.s32.totalorder %s18, 1
    %p172 = por %p170, %p171
    %p174 = scmp.ne.s32.totalorder %s157, %s173
    %p175 = scmp.eq.s32.totalorder %s18, 0
    %p176 = por %p174, %p175
    %p177 = scmp.le.s32.totalorder 1, %s12
    %p178 = scmp.lt.s32.totalorder %s12, 3
    %p179 = pnand %p177, %p178
    %p180 = pneg %p179
    // Predicated region
    $region9: #{tpu_custom_call.1} parent=5 // pred_check
      _
    $region10: #{tpu_custom_call.1} parent=5 // pred_check_branch
      %182 = sbr.rel (%p179) target = $region12
    $region11: #{tpu_custom_call.1} parent=5 // pred_region
      %s183 = ssub.s32 %s12, 1
      // Predicated region
      $region13: #{tpu_custom_call.1} parent=11 // pred_check
        %p184 = pneg %p59
      $region14: #{tpu_custom_call.1} parent=11 // pred_check_branch
        %186 = sbr.rel (%p184) target = $region16
      $region15: #{tpu_custom_call.1} parent=11 // pred_region
        _
      $region16: #{tpu_custom_call.1} parent=11 // pred_fallthru
        _
      // Predicated region
      $region17: #{tpu_custom_call.1} parent=11 // pred_check
        %p187 = pneg %p80
      $region18: #{tpu_custom_call.1} parent=11 // pred_check_branch
        %189 = sbr.rel (%p187) target = $region20
      $region19: #{tpu_custom_call.1} parent=11 // pred_region
        _
      $region20: #{tpu_custom_call.1} parent=11 // pred_fallthru
        _
      // Predicated region
      $region21: #{tpu_custom_call.1} parent=11 // pred_check
        %p190 = pneg %p101
      $region22: #{tpu_custom_call.1} parent=11 // pred_check_branch
        %192 = sbr.rel (%p190) target = $region24
      $region23: #{tpu_custom_call.1} parent=11 // pred_region
        _
      $region24: #{tpu_custom_call.1} parent=11 // pred_fallthru
        _
      // Predicated region
      $region25: #{tpu_custom_call.1} parent=11 // pred_check
        %p193 = pneg %p122
      $region26: #{tpu_custom_call.1} parent=11 // pred_check_branch
        %195 = sbr.rel (%p193) target = $region28
      $region27: #{tpu_custom_call.1} parent=11 // pred_region
        _
      $region28: #{tpu_custom_call.1} parent=11 // pred_fallthru
        _
      // Predicated region
      $region29: #{tpu_custom_call.1} parent=11 // pred_check
        %p196 = pneg %p143
      $region30: #{tpu_custom_call.1} parent=11 // pred_check_branch
        %198 = sbr.rel (%p196) target = $region32
      $region31: #{tpu_custom_call.1} parent=11 // pred_region
        _
      $region32: #{tpu_custom_call.1} parent=11 // pred_fallthru
        _
    $region12: #{tpu_custom_call.1} parent=5 // pred_fallthru
      _
    %p199 = scmp.lt.s32.totalorder %s12, 2
    // Predicated region
    $region33: #{tpu_custom_call.1} parent=5 // pred_check
      %p200 = pneg %p199
    $region34: #{tpu_custom_call.1} parent=5 // pred_check_branch
      %202 = sbr.rel (%p200) target = $region36
    $region35: #{tpu_custom_call.1} parent=5 // pred_region
      // Predicated region
      $region37: #{tpu_custom_call.1} parent=35 // pred_check
        %p203 = pneg %p32
      $region38: #{tpu_custom_call.1} parent=35 // pred_check_branch
        %205 = sbr.rel (%p203) target = $region40
      $region39: #{tpu_custom_call.1} parent=35 // pred_region
        %p206 = scmp.lt.s32.totalorder %s12, 1
        %s207 = scalar_select %p206, %s12, 1
        %s208 = smul.addr %s207, 8
        %s209 = smul.addr %s208, 8
        %s210 = scalar_lea.vmem %s0, %s209
      $region40: #{tpu_custom_call.1} parent=35 // pred_fallthru
        _
    $region36: #{tpu_custom_call.1} parent=5 // pred_fallthru
      _
    %p211 = scmp.le.s32.totalorder 1, %s12
    %p212 = scmp.lt.s32.totalorder %s12, 3
    %p213 = pnand %p211, %p212
    %p214 = pneg %p213
    // Predicated region
    $region41: #{tpu_custom_call.1} parent=5 // pred_check
      _
    $region42: #{tpu_custom_call.1} parent=5 // pred_check_branch
      %216 = sbr.rel (%p213) target = $region44
    $region43: #{tpu_custom_call.1} parent=5 // pred_region
      %s217 = ssub.s32 %s12, 1
      %p218 = scmp.lt.s32.totalorder %s17, 1
      %s219 = scalar_select %p218, %s17, 1
      %s220 = smul.addr %s219, 8
      %s221 = smul.addr %s220, 8
      %s222 = scalar_lea.vmem %s0, %s221
      %p223 = pneg %p38
      %p224 = pneg %p35
      %p225 = pneg %p59
      %p226 = pneg %p56
      %p227 = pneg %p80
      %p228 = pneg %p77
      %p229 = pneg %p101
      %p230 = pneg %p98
      %p231 = pneg %p122
      %p232 = pneg %p119
      %p233 = pneg %p143
      %p234 = pneg %p140
      %p235 = pneg %p169
      %p236 = pneg %p166
      %p237 = scmp.lt.s32.totalorder %s17, 1
      %s238 = scalar_select %p237, %s17, 1
      %s239 = smul.addr %s238, 10
      %s240 = smul.addr %s239, 8
      %s241 = scalar_lea.vmem %s6, %s240
      %p242 = scmp.lt.s32.totalorder %s17, 1
      %s243 = scalar_select %p242, %s17, 1
      %s244 = smul.addr %s243, 8
      %s245 = smul.addr %s244, 8
      %s246 = scalar_lea.vmem %s0, %s245
      %p247 = scmp.lt.s32.totalorder %s17, 1
      %s248 = scalar_select %p247, %s17, 1
      %s249 = smul.addr %s248, 10
      %s250 = smul.addr %s249, 8
      %s251 = scalar_lea.vmem %s6, %s250
      %vm252 = vcmask 31744
      %253 = vst.msk [vmem:[%s251] sm:$0xff] %vm252, 0.0
      %254 = vst.msk [vmem:[%s251 + $0x8] sm:$0xff] %vm252, 0.0
      %v255 = vld [vmem:[%s2] sm:$0xf]
      %v256 = vld [vmem:[%s3] sm:$0xff]
      %v257 = vld [vmem:[%s3 + $0x8] sm:$0xff]
      %v258 = vld [vmem:[%s3 + $0x10] sm:$0xff]
      %v259 = vld [vmem:[%s3 + $0x18] sm:$0xff]
      %v260 = vld [vmem:[%s4] sm:$0x1]
      %v261 = vld [vmem:[%s5] sm:$0x1]
      %v262 = vld [vmem:[%s246] sm:$0xff]
      %v263 = vld [vmem:[%s246 + $0x8] sm:$0xff]
      %v264 = vld [vmem:[%s246 + $0x10] sm:$0xff]
      %v265 = vld [vmem:[%s246 + $0x18] sm:$0xff]
      %v266 = vld [vmem:[%s246 + $0x20] sm:$0xff]
      %v267 = vld [vmem:[%s246 + $0x28] sm:$0xff]
      %v268 = vld [vmem:[%s1] sm:$0xf]
      %v270 = vlaneseq
      %v271 = vshrl.u32 %v270, 7
      %v272 = vsub.s32 0, %v271
      %v273 = vrot.slane %v260, %v272
      %v276 = vsel %vm252, %v262, 0
      %v279 = vsel %vm252, %v263, 0
      %v282 = vsel %vm252, %v264, 0
      %v285 = vsel %vm252, %v265, 0
      %v288 = vsel %vm252, %v266, 0
      %v291 = vsel %vm252, %v267, 0
      %vm293 = vcmask 1043456
      %v295 = vsel %vm293, %v268, 0
      %297 = vmatprep.subr.mxu0 0.0
      %298 = vmatpush1.msra.mxu0 %v295
      %299 = vmatprep.subr.mxu0 0.0
      %300 = vmatpush1.msra.mxu0 0.0
      %301 = vmatprep.subr.mxu0 0.0
      %302 = vmatpush1.msra.mxu0 0.0
      %303 = vmatprep.subr.mxu0 0.0
      %304 = vmatpush1.msra.mxu0 0.0
      %305 = vmatprep.subr.mxu0 0.0
      %306 = vmatpush1.msra.mxu0 0.0
      %307 = vmatprep.subr.mxu0 0.0
      %308 = vmatpush1.msra.mxu0 0.0
      %309 = vmatprep.subr.mxu0 0.0
      %310 = vmatpush1.msra.mxu0 0.0
      %311 = vmatprep.subr.mxu0 0.0
      %312 = vmatpush1.msra.mxu0 0.0
      %313 = vmatprep.subr.mxu0 0.0
      %314 = vmatpush1.msra.mxu0 0.0
      %315 = vmatprep.subr.mxu0 0.0
      %316 = vmatpush1.msra.mxu0 0.0
      %317 = vmatprep.subr.mxu0 0.0
      %318 = vmatpush1.msra.mxu0 0.0
      %319 = vmatprep.subr.mxu0 0.0
      %320 = vmatpush1.msra.mxu0 0.0
      %321 = vmatprep.subr.mxu0 0.0
      %322 = vmatpush1.msra.mxu0 0.0
      %323 = vmatprep.subr.mxu0 0.0
      %324 = vmatpush1.msra.mxu0 0.0
      %325 = vmatprep.subr.mxu0 0.0
      %326 = vmatpush1.msra.mxu0 0.0
      %327 = vmatprep.subr.mxu0 0.0
      %328 = vmatpush1.msra.mxu0 0.0
      %329 = vmatprep.subr.mxu0 0.0
      %330 = vmatpush1.msra.mxu0 0.0
      %331 = vmatprep.subr.mxu0 0.0
      %332 = vmatpush1.msra.mxu0 0.0
      %333 = vmatprep.subr.mxu0 0.0
      %334 = vmatpush1.msra.mxu0 0.0
      %335 = vmatprep.subr.mxu0 0.0
      %336 = vmatpush1.msra.mxu0 0.0
      %337 = vmatprep.subr.mxu0 0.0
      %338 = vmatpush1.msra.mxu0 0.0
      %339 = vmatprep.subr.mxu0 0.0
      %340 = vmatpush1.msra.mxu0 0.0
      %341 = vmatprep.subr.mxu0 0.0
      %342 = vmatpush1.msra.mxu0 0.0
      %343 = vmatprep.subr.mxu0 0.0
      %344 = vmatpush1.msra.mxu0 0.0
      %345 = vmatprep.subr.mxu0 0.0
      %346 = vmatpush1.msra.mxu0 0.0
      %347 = vmatprep.subr.mxu0 0.0
      %348 = vmatpush1.msra.mxu0 0.0
      %349 = vmatprep.subr.mxu0 0.0
      %350 = vmatpush1.msra.mxu0 0.0
      %351 = vmatprep.subr.mxu0 0.0
      %352 = vmatpush1.msra.mxu0 0.0
      %353 = vmatprep.subr.mxu0 0.0
      %354 = vmatpush1.msra.mxu0 0.0
      %355 = vmatprep.subr.mxu0 0.0
      %356 = vmatpush1.msra.mxu0 0.0
      %357 = vmatprep.subr.mxu0 0.0
      %358 = vmatpush1.msra.mxu0 0.0
      %359 = vmatprep.subr.mxu0 0.0
      %360 = vmatpush1.msra.mxu0 0.0
      %361 = vmatprep.mubr.f32.mxu0 0.0
      %362 = vmatmul.mubr.f32.gmra.mrb[0].mxu0 %v276
      %v363 = vpop.f32.mrb[0].mxu0
      %v364 = vadd.f32 %v273, %v363
      %v365 = vpop.f32.mrb[0].mxu0
      %366 = vmatprep.mubr.f32.mxu0 0.0
      %367 = vmatmul.mubr.f32.gmra.mrb[0].mxu0 %v279
      %v368 = vpop.f32.mrb[0].mxu0
      %v369 = vadd.f32 %v273, %v368
      %v370 = vpop.f32.mrb[0].mxu0
      %371 = vmatprep.mubr.f32.mxu0 0.0
      %372 = vmatmul.mubr.f32.gmra.mrb[0].mxu0 %v282
      %v373 = vpop.f32.mrb[0].mxu0
      %v374 = vadd.f32 %v273, %v373
      %v375 = vpop.f32.mrb[0].mxu0
      %376 = vmatprep.mubr.f32.mxu0 0.0
      %377 = vmatmul.mubr.f32.gmra.mrb[0].mxu0 %v285
      %v378 = vpop.f32.mrb[0].mxu0
      %v379 = vadd.f32 %v273, %v378
      %v380 = vpop.f32.mrb[0].mxu0
      %381 = vmatprep.mubr.f32.mxu0 0.0
      %382 = vmatmul.mubr.f32.gmra.mrb[0].mxu0 %v288
      %v383 = vpop.f32.mrb[0].mxu0
      %v384 = vadd.f32 %v273, %v383
      %v385 = vpop.f32.mrb[0].mxu0
      %386 = vmatprep.mubr.f32.mxu0 0.0
      %387 = vmatmul.mubr.f32.gmra.mrb[0].mxu0 %v291
      %v388 = vpop.f32.mrb[0].mxu0
      %v389 = vadd.f32 %v273, %v388
      %v390 = vpop.f32.mrb[0].mxu0
      %391 = vdwg.mxu0
      %v392 = vld [vmem:[%s251] sm:$0xff]
      %v393 = vld [vmem:[%s251 + $0x8] sm:$0xff]
      %395 = vset.pattern.permute.xlu0 0
      %396 = vperm.xlu0 %395, %v392
      %v397 = vpop.permute.xlu0 %396
      %400 = vset.pattern.permute.xlu0 0
      %401 = vperm.xlu0 %400, %v393
      %v402 = vpop.permute.xlu0 %401
      %v404 = vlaneseq
      %v405 = vshrl.u32 %v404, 7
      %v406 = vsub.s32 0, %v405
      %v407 = vrot.slane %v255, %v406
      %v408 = vmul.f32 %v397, %v407
      %v409 = vmul.f32 %v402, %v407
      %v410 = vadd.f32 %v273, %v408
      %v411 = vadd.f32 %v273, %v409
      %412 = vset.pattern.permute.xlu0 1
      %413 = vperm.xlu0 %412, %v392
      %v414 = vpop.permute.xlu0 %413
      %416 = vset.pattern.permute.xlu0 1
      %417 = vperm.xlu0 %416, %v393
      %v418 = vpop.permute.xlu0 %417
      %v420 = vlaneseq
      %v421 = vshrl.u32 %v420, 7
      %v422 = vsub.s32 1, %v421
      %v423 = vrot.slane %v255, %v422
      %v424 = vmul.f32 %v414, %v423
      %v425 = vmul.f32 %v418, %v423
      %v426 = vadd.f32 %v410, %v424
      %v427 = vadd.f32 %v411, %v425
      %428 = vset.pattern.permute.xlu0 2
      %429 = vperm.xlu0 %428, %v392
      %v430 = vpop.permute.xlu0 %429
      %432 = vset.pattern.permute.xlu0 2
      %433 = vperm.xlu0 %432, %v393
      %v434 = vpop.permute.xlu0 %433
      %v436 = vlaneseq
      %v437 = vshrl.u32 %v436, 7
      %v438 = vsub.s32 2, %v437
      %v439 = vrot.slane %v255, %v438
      %v440 = vmul.f32 %v430, %v439
      %v441 = vmul.f32 %v434, %v439
      %v442 = vadd.f32 %v426, %v440
      %v443 = vadd.f32 %v427, %v441
      %444 = vset.pattern.permute.xlu0 3
      %445 = vperm.xlu0 %444, %v392
      %v446 = vpop.permute.xlu0 %445
      %448 = vset.pattern.permute.xlu0 3
      %449 = vperm.xlu0 %448, %v393
      %v450 = vpop.permute.xlu0 %449
      %v452 = vlaneseq
      %v453 = vshrl.u32 %v452, 7
      %v454 = vsub.s32 3, %v453
      %v455 = vrot.slane %v255, %v454
      %v456 = vmul.f32 %v446, %v455
      %v457 = vmul.f32 %v450, %v455
      %v458 = vadd.f32 %v442, %v456
      %v459 = vadd.f32 %v443, %v457
      %v460 = vtanh.pop %v458
      %v461 = vtanh.pop %v459
      %v463 = vlaneseq
      %v464 = vshrl.u32 %v463, 7
      %v465 = vsub.s32 0, %v464
      %v466 = vrot.slane %v261, %v465
      %vm468 = vcmask 261120
      %v470 = vsel %vm468, %v460, 0
      %v473 = vsel %vm468, %v461, 0
      %475 = vmatprep.subr.mxu0 0.0
      %476 = vmatpush1.msra.mxu0 %v256
      %477 = vmatprep.subr.mxu0 0.0
      %478 = vmatpush1.msra.mxu0 %v257
      %479 = vmatprep.subr.mxu0 0.0
      %480 = vmatpush1.msra.mxu0 %v258
      %481 = vmatprep.subr.mxu0 0.0
      %482 = vmatpush1.msra.mxu0 %v259
      %483 = vmatprep.subr.mxu0 0.0
      %484 = vmatpush1.msra.mxu0 0.0
      %485 = vmatprep.subr.mxu0 0.0
      %486 = vmatpush1.msra.mxu0 0.0
      %487 = vmatprep.subr.mxu0 0.0
      %488 = vmatpush1.msra.mxu0 0.0
      %489 = vmatprep.subr.mxu0 0.0
      %490 = vmatpush1.msra.mxu0 0.0
      %491 = vmatprep.subr.mxu0 0.0
      %492 = vmatpush1.msra.mxu0 0.0
      %493 = vmatprep.subr.mxu0 0.0
      %494 = vmatpush1.msra.mxu0 0.0
      %495 = vmatprep.subr.mxu0 0.0
      %496 = vmatpush1.msra.mxu0 0.0
      %497 = vmatprep.subr.mxu0 0.0
      %498 = vmatpush1.msra.mxu0 0.0
      %499 = vmatprep.subr.mxu0 0.0
      %500 = vmatpush1.msra.mxu0 0.0
      %501 = vmatprep.subr.mxu0 0.0
      %502 = vmatpush1.msra.mxu0 0.0
      %503 = vmatprep.subr.mxu0 0.0
      %504 = vmatpush1.msra.mxu0 0.0
      %505 = vmatprep.subr.mxu0 0.0
      %506 = vmatpush1.msra.mxu0 0.0
      %507 = vmatprep.subr.mxu0 0.0
      %508 = vmatpush1.msra.mxu0 0.0
      %509 = vmatprep.subr.mxu0 0.0
      %510 = vmatpush1.msra.mxu0 0.0
      %511 = vmatprep.subr.mxu0 0.0
      %512 = vmatpush1.msra.mxu0 0.0
      %513 = vmatprep.subr.mxu0 0.0
      %514 = vmatpush1.msra.mxu0 0.0
      %515 = vmatprep.subr.mxu0 0.0
      %516 = vmatpush1.msra.mxu0 0.0
      %517 = vmatprep.subr.mxu0 0.0
      %518 = vmatpush1.msra.mxu0 0.0
      %519 = vmatprep.subr.mxu0 0.0
      %520 = vmatpush1.msra.mxu0 0.0
      %521 = vmatprep.subr.mxu0 0.0
      %522 = vmatpush1.msra.mxu0 0.0
      %523 = vmatprep.subr.mxu0 0.0
      %524 = vmatpush1.msra.mxu0 0.0
      %525 = vmatprep.subr.mxu0 0.0
      %526 = vmatpush1.msra.mxu0 0.0
      %527 = vmatprep.subr.mxu0 0.0
      %528 = vmatpush1.msra.mxu0 0.0
      %529 = vmatprep.subr.mxu0 0.0
      %530 = vmatpush1.msra.mxu0 0.0
      %531 = vmatprep.subr.mxu0 0.0
      %532 = vmatpush1.msra.mxu0 0.0
      %533 = vmatprep.subr.mxu0 0.0
      %534 = vmatpush1.msra.mxu0 0.0
      %535 = vmatprep.subr.mxu0 0.0
      %536 = vmatpush1.msra.mxu0 0.0
      %537 = vmatprep.subr.mxu0 0.0
      %538 = vmatpush1.msra.mxu0 0.0
      %539 = vmatprep.mubr.f32.mxu0 0.0
      %540 = vmatmul.mubr.f32.gmra.mrb[0].mxu0 %v470
      %v541 = vpop.f32.mrb[0].mxu0
      %v542 = vadd.f32 %v466, %v541
      %v543 = vpop.f32.mrb[0].mxu0
      %544 = vmatprep.mubr.f32.mxu0 0.0
      %545 = vmatmul.mubr.f32.gmra.mrb[0].mxu0 %v473
      %v546 = vpop.f32.mrb[0].mxu0
      %v547 = vadd.f32 %v466, %v546
      %v548 = vpop.f32.mrb[0].mxu0
      %549 = vdwg.mxu0
      %550 = vst.msk [vmem:[%s251 + $0x10] sm:$0xff] %vm252, %v542
      %551 = vst.msk [vmem:[%s251 + $0x18] sm:$0xff] %vm252, %v547
      %v552 = vld [vmem:[%s251 + $0x10] sm:$0xff]
      %v553 = vld [vmem:[%s251 + $0x18] sm:$0xff]
      %555 = vset.pattern.permute.xlu0 0
      %556 = vperm.xlu0 %555, %v552
      %v557 = vpop.permute.xlu0 %556
      %560 = vset.pattern.permute.xlu0 0
      %561 = vperm.xlu0 %560, %v553
      %v562 = vpop.permute.xlu0 %561
      %v564 = vmul.f32 %v557, %v407
      %v565 = vmul.f32 %v562, %v407
      %v566 = vadd.f32 %v364, %v564
      %v567 = vadd.f32 %v369, %v565
      %568 = vset.pattern.permute.xlu0 1
      %569 = vperm.xlu0 %568, %v552
      %v570 = vpop.permute.xlu0 %569
      %572 = vset.pattern.permute.xlu0 1
      %573 = vperm.xlu0 %572, %v553
      %v574 = vpop.permute.xlu0 %573
      %v576 = vmul.f32 %v570, %v423
      %v577 = vmul.f32 %v574, %v423
      %v578 = vadd.f32 %v566, %v576
      %v579 = vadd.f32 %v567, %v577
      %580 = vset.pattern.permute.xlu0 2
      %581 = vperm.xlu0 %580, %v552
      %v582 = vpop.permute.xlu0 %581
      %584 = vset.pattern.permute.xlu0 2
      %585 = vperm.xlu0 %584, %v553
      %v586 = vpop.permute.xlu0 %585
      %v588 = vmul.f32 %v582, %v439
      %v589 = vmul.f32 %v586, %v439
      %v590 = vadd.f32 %v578, %v588
      %v591 = vadd.f32 %v579, %v589
      %592 = vset.pattern.permute.xlu0 3
      %593 = vperm.xlu0 %592, %v552
      %v594 = vpop.permute.xlu0 %593
      %596 = vset.pattern.permute.xlu0 3
      %597 = vperm.xlu0 %596, %v553
      %v598 = vpop.permute.xlu0 %597
      %v600 = vmul.f32 %v594, %v455
      %v601 = vmul.f32 %v598, %v455
      %v602 = vadd.f32 %v590, %v600
      %v603 = vadd.f32 %v591, %v601
      %v604 = vtanh.pop %v602
      %v605 = vtanh.pop %v603
      %v607 = vsel %vm468, %v604, 0
      %v610 = vsel %vm468, %v605, 0
      %612 = vmatprep.subr.mxu0 0.0
      %613 = vmatpush1.msra.mxu0 %v256
      %614 = vmatprep.subr.mxu0 0.0
      %615 = vmatpush1.msra.mxu0 %v257
      %616 = vmatprep.subr.mxu0 0.0
      %617 = vmatpush1.msra.mxu0 %v258
      %618 = vmatprep.subr.mxu0 0.0
      %619 = vmatpush1.msra.mxu0 %v259
      %620 = vmatprep.subr.mxu0 0.0
      %621 = vmatpush1.msra.mxu0 0.0
      %622 = vmatprep.subr.mxu0 0.0
      %623 = vmatpush1.msra.mxu0 0.0
      %624 = vmatprep.subr.mxu0 0.0
      %625 = vmatpush1.msra.mxu0 0.0
      %626 = vmatprep.subr.mxu0 0.0
      %627 = vmatpush1.msra.mxu0 0.0
      %628 = vmatprep.subr.mxu0 0.0
      %629 = vmatpush1.msra.mxu0 0.0
      %630 = vmatprep.subr.mxu0 0.0
      %631 = vmatpush1.msra.mxu0 0.0
      %632 = vmatprep.subr.mxu0 0.0
      %633 = vmatpush1.msra.mxu0 0.0
      %634 = vmatprep.subr.mxu0 0.0
      %635 = vmatpush1.msra.mxu0 0.0
      %636 = vmatprep.subr.mxu0 0.0
      %637 = vmatpush1.msra.mxu0 0.0
      %638 = vmatprep.subr.mxu0 0.0
      %639 = vmatpush1.msra.mxu0 0.0
      %640 = vmatprep.subr.mxu0 0.0
      %641 = vmatpush1.msra.mxu0 0.0
      %642 = vmatprep.subr.mxu0 0.0
      %643 = vmatpush1.msra.mxu0 0.0
      %644 = vmatprep.subr.mxu0 0.0
      %645 = vmatpush1.msra.mxu0 0.0
      %646 = vmatprep.subr.mxu0 0.0
      %647 = vmatpush1.msra.mxu0 0.0
      %648 = vmatprep.subr.mxu0 0.0
      %649 = vmatpush1.msra.mxu0 0.0
      %650 = vmatprep.subr.mxu0 0.0
      %651 = vmatpush1.msra.mxu0 0.0
      %652 = vmatprep.subr.mxu0 0.0
      %653 = vmatpush1.msra.mxu0 0.0
      %654 = vmatprep.subr.mxu0 0.0
      %655 = vmatpush1.msra.mxu0 0.0
      %656 = vmatprep.subr.mxu0 0.0
      %657 = vmatpush1.msra.mxu0 0.0
      %658 = vmatprep.subr.mxu0 0.0
      %659 = vmatpush1.msra.mxu0 0.0
      %660 = vmatprep.subr.mxu0 0.0
      %661 = vmatpush1.msra.mxu0 0.0
      %662 = vmatprep.subr.mxu0 0.0
      %663 = vmatpush1.msra.mxu0 0.0
      %664 = vmatprep.subr.mxu0 0.0
      %665 = vmatpush1.msra.mxu0 0.0
      %666 = vmatprep.subr.mxu0 0.0
      %667 = vmatpush1.msra.mxu0 0.0
      %668 = vmatprep.subr.mxu0 0.0
      %669 = vmatpush1.msra.mxu0 0.0
      %670 = vmatprep.subr.mxu0 0.0
      %671 = vmatpush1.msra.mxu0 0.0
      %672 = vmatprep.subr.mxu0 0.0
      %673 = vmatpush1.msra.mxu0 0.0
      %674 = vmatprep.subr.mxu0 0.0
      %675 = vmatpush1.msra.mxu0 0.0
      %676 = vmatprep.mubr.f32.mxu0 0.0
      %677 = vmatmul.mubr.f32.gmra.mrb[0].mxu0 %v607
      %v678 = vpop.f32.mrb[0].mxu0
      %v679 = vadd.f32 %v466, %v678
      %v680 = vpop.f32.mrb[0].mxu0
      %681 = vmatprep.mubr.f32.mxu0 0.0
      %682 = vmatmul.mubr.f32.gmra.mrb[0].mxu0 %v610
      %v683 = vpop.f32.mrb[0].mxu0
      %v684 = vadd.f32 %v466, %v683
      %v685 = vpop.f32.mrb[0].mxu0
      %686 = vdwg.mxu0
      %687 = vst.msk [vmem:[%s251 + $0x20] sm:$0xff] %vm252, %v679
      %688 = vst.msk [vmem:[%s251 + $0x28] sm:$0xff] %vm252, %v684
      %v689 = vld [vmem:[%s251 + $0x20] sm:$0xff]
      %v690 = vld [vmem:[%s251 + $0x28] sm:$0xff]
      %692 = vset.pattern.permute.xlu0 0
      %693 = vperm.xlu0 %692, %v689
      %v694 = vpop.permute.xlu0 %693
      %697 = vset.pattern.permute.xlu0 0
      %698 = vperm.xlu0 %697, %v690
      %v699 = vpop.permute.xlu0 %698
      %v701 = vmul.f32 %v694, %v407
      %v702 = vmul.f32 %v699, %v407
      %v703 = vadd.f32 %v374, %v701
      %v704 = vadd.f32 %v379, %v702
      %705 = vset.pattern.permute.xlu0 1
      %706 = vperm.xlu0 %705, %v689
      %v707 = vpop.permute.xlu0 %706
      %709 = vset.pattern.permute.xlu0 1
      %710 = vperm.xlu0 %709, %v690
      %v711 = vpop.permute.xlu0 %710
      %v713 = vmul.f32 %v707, %v423
      %v714 = vmul.f32 %v711, %v423
      %v715 = vadd.f32 %v703, %v713
      %v716 = vadd.f32 %v704, %v714
      %717 = vset.pattern.permute.xlu0 2
      %718 = vperm.xlu0 %717, %v689
      %v719 = vpop.permute.xlu0 %718
      %721 = vset.pattern.permute.xlu0 2
      %722 = vperm.xlu0 %721, %v690
      %v723 = vpop.permute.xlu0 %722
      %v725 = vmul.f32 %v719, %v439
      %v726 = vmul.f32 %v723, %v439
      %v727 = vadd.f32 %v715, %v725
      %v728 = vadd.f32 %v716, %v726
      %729 = vset.pattern.permute.xlu0 3
      %730 = vperm.xlu0 %729, %v689
      %v731 = vpop.permute.xlu0 %730
      %733 = vset.pattern.permute.xlu0 3
      %734 = vperm.xlu0 %733, %v690
      %v735 = vpop.permute.xlu0 %734
      %v737 = vmul.f32 %v731, %v455
      %v738 = vmul.f32 %v735, %v455
      %v739 = vadd.f32 %v727, %v737
      %v740 = vadd.f32 %v728, %v738
      %v741 = vtanh.pop %v739
      %v742 = vtanh.pop %v740
      %v744 = vsel %vm468, %v741, 0
      %v747 = vsel %vm468, %v742, 0
      %749 = vmatprep.subr.mxu0 0.0
      %750 = vmatpush1.msra.mxu0 %v256
      %751 = vmatprep.subr.mxu0 0.0
      %752 = vmatpush1.msra.mxu0 %v257
      %753 = vmatprep.subr.mxu0 0.0
      %754 = vmatpush1.msra.mxu0 %v258
      %755 = vmatprep.subr.mxu0 0.0
      %756 = vmatpush1.msra.mxu0 %v259
      %757 = vmatprep.subr.mxu0 0.0
      %758 = vmatpush1.msra.mxu0 0.0
      %759 = vmatprep.subr.mxu0 0.0
      %760 = vmatpush1.msra.mxu0 0.0
      %761 = vmatprep.subr.mxu0 0.0
      %762 = vmatpush1.msra.mxu0 0.0
      %763 = vmatprep.subr.mxu0 0.0
      %764 = vmatpush1.msra.mxu0 0.0
      %765 = vmatprep.subr.mxu0 0.0
      %766 = vmatpush1.msra.mxu0 0.0
      %767 = vmatprep.subr.mxu0 0.0
      %768 = vmatpush1.msra.mxu0 0.0
      %769 = vmatprep.subr.mxu0 0.0
      %770 = vmatpush1.msra.mxu0 0.0
      %771 = vmatprep.subr.mxu0 0.0
      %772 = vmatpush1.msra.mxu0 0.0
      %773 = vmatprep.subr.mxu0 0.0
      %774 = vmatpush1.msra.mxu0 0.0
      %775 = vmatprep.subr.mxu0 0.0
      %776 = vmatpush1.msra.mxu0 0.0
      %777 = vmatprep.subr.mxu0 0.0
      %778 = vmatpush1.msra.mxu0 0.0
      %779 = vmatprep.subr.mxu0 0.0
      %780 = vmatpush1.msra.mxu0 0.0
      %781 = vmatprep.subr.mxu0 0.0
      %782 = vmatpush1.msra.mxu0 0.0
      %783 = vmatprep.subr.mxu0 0.0
      %784 = vmatpush1.msra.mxu0 0.0
      %785 = vmatprep.subr.mxu0 0.0
      %786 = vmatpush1.msra.mxu0 0.0
      %787 = vmatprep.subr.mxu0 0.0
      %788 = vmatpush1.msra.mxu0 0.0
      %789 = vmatprep.subr.mxu0 0.0
      %790 = vmatpush1.msra.mxu0 0.0
      %791 = vmatprep.subr.mxu0 0.0
      %792 = vmatpush1.msra.mxu0 0.0
      %793 = vmatprep.subr.mxu0 0.0
      %794 = vmatpush1.msra.mxu0 0.0
      %795 = vmatprep.subr.mxu0 0.0
      %796 = vmatpush1.msra.mxu0 0.0
      %797 = vmatprep.subr.mxu0 0.0
      %798 = vmatpush1.msra.mxu0 0.0
      %799 = vmatprep.subr.mxu0 0.0
      %800 = vmatpush1.msra.mxu0 0.0
      %801 = vmatprep.subr.mxu0 0.0
      %802 = vmatpush1.msra.mxu0 0.0
      %803 = vmatprep.subr.mxu0 0.0
      %804 = vmatpush1.msra.mxu0 0.0
      %805 = vmatprep.subr.mxu0 0.0
      %806 = vmatpush1.msra.mxu0 0.0
      %807 = vmatprep.subr.mxu0 0.0
      %808 = vmatpush1.msra.mxu0 0.0
      %809 = vmatprep.subr.mxu0 0.0
      %810 = vmatpush1.msra.mxu0 0.0
      %811 = vmatprep.subr.mxu0 0.0
      %812 = vmatpush1.msra.mxu0 0.0
      %813 = vmatprep.mubr.f32.mxu0 0.0
      %814 = vmatmul.mubr.f32.gmra.mrb[0].mxu0 %v744
      %v815 = vpop.f32.mrb[0].mxu0
      %v816 = vadd.f32 %v466, %v815
      %v817 = vpop.f32.mrb[0].mxu0
      %818 = vmatprep.mubr.f32.mxu0 0.0
      %819 = vmatmul.mubr.f32.gmra.mrb[0].mxu0 %v747
      %v820 = vpop.f32.mrb[0].mxu0
      %v821 = vadd.f32 %v466, %v820
      %v822 = vpop.f32.mrb[0].mxu0
      %823 = vdwg.mxu0
      %824 = vst.msk [vmem:[%s251 + $0x30] sm:$0xff] %vm252, %v816
      %825 = vst.msk [vmem:[%s251 + $0x38] sm:$0xff] %vm252, %v821
      %v826 = vld [vmem:[%s251 + $0x30] sm:$0xff]
      %v827 = vld [vmem:[%s251 + $0x38] sm:$0xff]
      %829 = vset.pattern.permute.xlu0 0
      %830 = vperm.xlu0 %829, %v826
      %v831 = vpop.permute.xlu0 %830
      %834 = vset.pattern.permute.xlu0 0
      %835 = vperm.xlu0 %834, %v827
      %v836 = vpop.permute.xlu0 %835
      %v838 = vmul.f32 %v831, %v407
      %v839 = vmul.f32 %v836, %v407
      %v840 = vadd.f32 %v384, %v838
      %v841 = vadd.f32 %v389, %v839
      %842 = vset.pattern.permute.xlu0 1
      %843 = vperm.xlu0 %842, %v826
      %v844 = vpop.permute.xlu0 %843
      %846 = vset.pattern.permute.xlu0 1
      %847 = vperm.xlu0 %846, %v827
      %v848 = vpop.permute.xlu0 %847
      %v850 = vmul.f32 %v844, %v423
      %v851 = vmul.f32 %v848, %v423
      %v852 = vadd.f32 %v840, %v850
      %v853 = vadd.f32 %v841, %v851
      %854 = vset.pattern.permute.xlu0 2
      %855 = vperm.xlu0 %854, %v826
      %v856 = vpop.permute.xlu0 %855
      %858 = vset.pattern.permute.xlu0 2
      %859 = vperm.xlu0 %858, %v827
      %v860 = vpop.permute.xlu0 %859
      %v862 = vmul.f32 %v856, %v439
      %v863 = vmul.f32 %v860, %v439
      %v864 = vadd.f32 %v852, %v862
      %v865 = vadd.f32 %v853, %v863
      %866 = vset.pattern.permute.xlu0 3
      %867 = vperm.xlu0 %866, %v826
      %v868 = vpop.permute.xlu0 %867
      %870 = vset.pattern.permute.xlu0 3
      %871 = vperm.xlu0 %870, %v827
      %v872 = vpop.permute.xlu0 %871
      %v874 = vmul.f32 %v868, %v455
      %v875 = vmul.f32 %v872, %v455
      %v876 = vadd.f32 %v864, %v874
      %v877 = vadd.f32 %v865, %v875
      %v878 = vtanh.pop %v876
      %v879 = vtanh.pop %v877
      %v881 = vsel %vm468, %v878, 0
      %v884 = vsel %vm468, %v879, 0
      %886 = vmatprep.subr.mxu0 0.0
      %887 = vmatpush1.msra.mxu0 %v256
      %888 = vmatprep.subr.mxu0 0.0
      %889 = vmatpush1.msra.mxu0 %v257
      %890 = vmatprep.subr.mxu0 0.0
      %891 = vmatpush1.msra.mxu0 %v258
      %892 = vmatprep.subr.mxu0 0.0
      %893 = vmatpush1.msra.mxu0 %v259
      %894 = vmatprep.subr.mxu0 0.0
      %895 = vmatpush1.msra.mxu0 0.0
      %896 = vmatprep.subr.mxu0 0.0
      %897 = vmatpush1.msra.mxu0 0.0
      %898 = vmatprep.subr.mxu0 0.0
      %899 = vmatpush1.msra.mxu0 0.0
      %900 = vmatprep.subr.mxu0 0.0
      %901 = vmatpush1.msra.mxu0 0.0
      %902 = vmatprep.subr.mxu0 0.0
      %903 = vmatpush1.msra.mxu0 0.0
      %904 = vmatprep.subr.mxu0 0.0
      %905 = vmatpush1.msra.mxu0 0.0
      %906 = vmatprep.subr.mxu0 0.0
      %907 = vmatpush1.msra.mxu0 0.0
      %908 = vmatprep.subr.mxu0 0.0
      %909 = vmatpush1.msra.mxu0 0.0
      %910 = vmatprep.subr.mxu0 0.0
      %911 = vmatpush1.msra.mxu0 0.0
      %912 = vmatprep.subr.mxu0 0.0
      %913 = vmatpush1.msra.mxu0 0.0
      %914 = vmatprep.subr.mxu0 0.0
      %915 = vmatpush1.msra.mxu0 0.0
      %916 = vmatprep.subr.mxu0 0.0
      %917 = vmatpush1.msra.mxu0 0.0
      %918 = vmatprep.subr.mxu0 0.0
      %919 = vmatpush1.msra.mxu0 0.0
      %920 = vmatprep.subr.mxu0 0.0
      %921 = vmatpush1.msra.mxu0 0.0
      %922 = vmatprep.subr.mxu0 0.0
      %923 = vmatpush1.msra.mxu0 0.0
      %924 = vmatprep.subr.mxu0 0.0
      %925 = vmatpush1.msra.mxu0 0.0
      %926 = vmatprep.subr.mxu0 0.0
      %927 = vmatpush1.msra.mxu0 0.0
      %928 = vmatprep.subr.mxu0 0.0
      %929 = vmatpush1.msra.mxu0 0.0
      %930 = vmatprep.subr.mxu0 0.0
      %931 = vmatpush1.msra.mxu0 0.0
      %932 = vmatprep.subr.mxu0 0.0
      %933 = vmatpush1.msra.mxu0 0.0
      %934 = vmatprep.subr.mxu0 0.0
      %935 = vmatpush1.msra.mxu0 0.0
      %936 = vmatprep.subr.mxu0 0.0
      %937 = vmatpush1.msra.mxu0 0.0
      %938 = vmatprep.subr.mxu0 0.0
      %939 = vmatpush1.msra.mxu0 0.0
      %940 = vmatprep.subr.mxu0 0.0
      %941 = vmatpush1.msra.mxu0 0.0
      %942 = vmatprep.subr.mxu0 0.0
      %943 = vmatpush1.msra.mxu0 0.0
      %944 = vmatprep.subr.mxu0 0.0
      %945 = vmatpush1.msra.mxu0 0.0
      %946 = vmatprep.subr.mxu0 0.0
      %947 = vmatpush1.msra.mxu0 0.0
      %948 = vmatprep.subr.mxu0 0.0
      %949 = vmatpush1.msra.mxu0 0.0
      %950 = vmatprep.mubr.f32.mxu0 0.0
      %951 = vmatmul.mubr.f32.gmra.mrb[0].mxu0 %v881
      %v952 = vpop.f32.mrb[0].mxu0
      %v953 = vadd.f32 %v466, %v952
      %v954 = vpop.f32.mrb[0].mxu0
      %955 = vmatprep.mubr.f32.mxu0 0.0
      %956 = vmatmul.mubr.f32.gmra.mrb[0].mxu0 %v884
      %v957 = vpop.f32.mrb[0].mxu0
      %v958 = vadd.f32 %v466, %v957
      %v959 = vpop.f32.mrb[0].mxu0
      %960 = vdwg.mxu0
      %961 = vst.msk [vmem:[%s251 + $0x40] sm:$0xff] %vm252, %v953
      %962 = vst.msk [vmem:[%s251 + $0x48] sm:$0xff] %vm252, %v958
      %p963 = scmp.lt.s32.totalorder %s17, 1
      %s964 = scalar_select %p963, %s17, 1
      %s965 = smul.addr %s964, 10
      %s966 = smul.addr %s965, 8
      %s967 = scalar_lea.vmem %s6, %s966
      // Predicated region
      $region45: #{tpu_custom_call.1} parent=43 // pred_check
        %p968 = pneg %p166
      $region46: #{tpu_custom_call.1} parent=43 // pred_check_branch
        %970 = sbr.rel (%p968) target = $region48
      $region47: #{tpu_custom_call.1} parent=43 // pred_region
        _
      $region48: #{tpu_custom_call.1} parent=43 // pred_fallthru
        _
    $region44: #{tpu_custom_call.1} parent=5 // pred_fallthru
      _
    %p971 = scmp.le.s32.totalorder 2, %s12
    // Predicated region
    $region49: #{tpu_custom_call.1} parent=5 // pred_check
      %p972 = pneg %p971
    $region50: #{tpu_custom_call.1} parent=5 // pred_check_branch
      %974 = sbr.rel (%p972) target = $region52
    $region51: #{tpu_custom_call.1} parent=5 // pred_region
      %s975 = ssub.s32 %s12, 2
      // Predicated region
      $region53: #{tpu_custom_call.1} parent=51 // pred_check
        %p976 = pneg %p172
      $region54: #{tpu_custom_call.1} parent=51 // pred_check_branch
        %978 = sbr.rel (%p976) target = $region56
      $region55: #{tpu_custom_call.1} parent=51 // pred_region
        %p979 = scmp.lt.s32.totalorder %s18, 1
        %s980 = scalar_select %p979, %s18, 1
        %s981 = smul.addr %s980, 10
        %s982 = smul.addr %s981, 8
        %s983 = scalar_lea.vmem %s6, %s982
      $region56: #{tpu_custom_call.1} parent=51 // pred_fallthru
        _
    $region52: #{tpu_custom_call.1} parent=5 // pred_fallthru
      _
  $region6: #{tpu_custom_call.1} parent=0 // loop_footer
    %s16 = sadd.s32 1, %s12
  $region7: #{tpu_custom_call.1} parent=0 // loop_footer_branch
    %11 = sbr.rel target = $region3
  $region8: #{tpu_custom_call.1} parent=0 // loop_exit
    _

</llo_original>
